<compile_context>
chip_gen: v5e
topology: v5e:2x2
jax: 0.10.0
libtpu: 0.0.40
codegen_flags: <defaults>
</compile_context>

<pallas_src>
import jax
import jax.numpy as jnp
from jax import lax
from jax.experimental import pallas as pl
from jax.experimental.pallas import tpu as pltpu


def attention_kernel(xt_ref, w1t_ref, b1_ref, w2_ref, b2_ref, ctx_ref, energy_ref):
    # xt_ref:     (B, H, S)   input, sequence on the lane axis
    # w1t_ref:    (BN, H)     first Linear weight, transposed
    # b1_ref:     (BN, 1)     first Linear bias (column)
    # w2_ref:     (BN, 1)     second Linear weight (column)
    # b2_ref:     (1,)        second Linear bias, scalar in SMEM
    # ctx_ref:    (B, H)      attention context output
    # energy_ref: (B, S)      energy output, lane-dense ((B, S, 1) in wrapper)
    B = xt_ref.shape[0]

    w1t = w1t_ref[...]                    # (BN, H)
    b1 = b1_ref[...]                      # (BN, 1)
    w2 = w2_ref[...]                      # (BN, 1)
    b2 = b2_ref[0]                        # scalar from SMEM

    for b in range(B):                    # static unroll — single kernel step
        xt_b = xt_ref[b]                  # (H, S)

        # First Linear + Tanh in transposed orientation: (BN,H) @ (H,S) -> (BN,S)
        h = jnp.tanh(
            jnp.dot(w1t, xt_b, preferred_element_type=jnp.float32) + b1
        )                                                        # (BN, S)

        # Second Linear (BN -> 1) as VPU multiply + sublane reduce (keeps the
        # single-output-column work off the MXU); result is lane-dense in S.
        e = jnp.sum(h * w2, axis=0, keepdims=True) + b2          # (1, S)

        # Softmax over the sequence axis (== dim=-2 of the (S, 1) energy).
        m = jnp.max(e, axis=1, keepdims=True)                    # (1, 1)
        p = jnp.exp(e - m)                                       # (1, S)
        denom = jnp.sum(p, axis=1, keepdims=True)                # (1, 1)
        alpha = p * pl.reciprocal(denom, approx=True)            # (1, S)

        # Context: sum_s alpha[s] * x[s, :]  ==  contract alpha (1,S) with
        # x^T (H,S) over S; produces a lane-dense (1, H) row directly.
        ctx = lax.dot_general(
            alpha, xt_b,
            dimension_numbers=(((1,), (1,)), ((), ())),
            preferred_element_type=jnp.float32,
        )                                                        # (1, H)

        ctx_ref[pl.ds(b, 1), :] = ctx.astype(ctx_ref.dtype)
        energy_ref[pl.ds(b, 1), :] = e.astype(energy_ref.dtype)


def attention_forward(x, w1, b1, w2, b2):
    """x: (B, S, H) float32.  Returns (context (B, H), energy (B, S, 1))."""
    B, S, H = x.shape
    BN = w1.shape[1]

    # Layout plumbing on the XLA side (tiny tensors): present the sequence on
    # the lane axis so the kernel never needs an in-kernel transpose/relayout.
    x_t = jnp.transpose(x, (0, 2, 1))      # (B, H, S)
    w1_t = w1.T                            # (BN, H)
    b1_col = b1.reshape(BN, 1)
    w2_col = w2.reshape(BN, 1)
    b2_1d = b2.reshape(1)

    ctx, energy = pl.pallas_call(
        attention_kernel,
        out_shape=(
            jax.ShapeDtypeStruct((B, H), x.dtype),
            jax.ShapeDtypeStruct((B, S), x.dtype),
        ),
        in_specs=[
            pl.BlockSpec(memory_space=pltpu.MemorySpace.VMEM),   # x_t
            pl.BlockSpec(memory_space=pltpu.MemorySpace.VMEM),   # w1_t
            pl.BlockSpec(memory_space=pltpu.MemorySpace.VMEM),   # b1_col
            pl.BlockSpec(memory_space=pltpu.MemorySpace.VMEM),   # w2_col
            pl.BlockSpec(memory_space=pltpu.MemorySpace.SMEM),   # b2 scalar
        ],
        out_specs=(
            pl.BlockSpec(memory_space=pltpu.MemorySpace.VMEM),
            pl.BlockSpec(memory_space=pltpu.MemorySpace.VMEM),
        ),
        compiler_params=pltpu.CompilerParams(
            # Explicit, generation-safe VMEM budget (usage here is a few KB).
            vmem_limit_bytes=16 * 1024 * 1024,
        ),
    )(x_t, w1_t, b1_col, w2_col, b2_1d)

    # Restore the PyTorch-matching (B, S, 1) energy shape.
    return ctx, energy[:, :, None]


def _reference(x, w1, b1, w2, b2):
    e = jnp.tanh(x @ w1 + b1) @ w2 + b2          # (B, S, 1)
    alpha = jax.nn.softmax(e, axis=-2)
    return jnp.sum(x * alpha, axis=-2), e


if __name__ == "__main__":
    B, S, H, BN = 2, 8, 32, 16

    key = jax.random.PRNGKey(0)
    kx, k1, k2, k3, k4 = jax.random.split(key, 5)

    x = jax.random.normal(kx, (B, S, H), dtype=jnp.float32)

    # Deterministic "PyTorch-like" uniform init for the two Linear layers.
    lim1 = 1.0 / (H ** 0.5)
    w1 = jax.random.uniform(k1, (H, BN), jnp.float32, -lim1, lim1)
    b1 = jax.random.uniform(k2, (BN,), jnp.float32, -lim1, lim1)
    lim2 = 1.0 / (BN ** 0.5)
    w2 = jax.random.uniform(k3, (BN, 1), jnp.float32, -lim2, lim2)
    b2 = jax.random.uniform(k4, (1,), jnp.float32, -lim2, lim2)

    ctx, energy = attention_forward(x, w1, b1, w2, b2)
    jax.block_until_ready((ctx, energy))

    ctx_ref, energy_ref = _reference(x, w1, b1, w2, b2)
    assert ctx.shape == (B, H) and energy.shape == (B, S, 1)
    # Energy is computed exactly (tight tolerance); the context path uses the
    # approximate EUP reciprocal in the softmax normalization, so compare it
    # at a slightly looser tolerance.
    assert jnp.allclose(energy, energy_ref, atol=1e-5, rtol=1e-5)
    assert jnp.allclose(ctx, ctx_ref, atol=5e-3, rtol=5e-3)

    print("KERNEL_OK")
</pallas_src>

<mosaic_0001>
module attributes {stable_mosaic.version = 11 : i64} {
  func.func @attention_kernel(%arg0: memref<2x32x8xf32, #tpu.memory_space<vmem>>, %arg1: memref<16x32xf32, #tpu.memory_space<vmem>>, %arg2: memref<16x1xf32, #tpu.memory_space<vmem>>, %arg3: memref<16x1xf32, #tpu.memory_space<vmem>>, %arg4: memref<1xf32, #tpu.memory_space<smem>>, %arg5: memref<2x32xf32, #tpu.memory_space<vmem>>, %arg6: memref<2x8xf32, #tpu.memory_space<vmem>>) attributes {dimension_semantics = [], scalar_prefetch = 0 : i64, scratch_operands = 0 : i64, tpu.core_type = #tpu.core_type<tc>} {
    %c0 = arith.constant 0 : index
    %c0_0 = arith.constant 0 : index
    %0 = vector.load %arg1[%c0, %c0_0] : memref<16x32xf32, #tpu.memory_space<vmem>>, vector<16x32xf32>
    %c0_1 = arith.constant 0 : index
    %c0_2 = arith.constant 0 : index
    %1 = vector.load %arg2[%c0_1, %c0_2] : memref<16x1xf32, #tpu.memory_space<vmem>>, vector<16x1xf32>
    %c0_3 = arith.constant 0 : index
    %c0_4 = arith.constant 0 : index
    %2 = vector.load %arg3[%c0_3, %c0_4] : memref<16x1xf32, #tpu.memory_space<vmem>>, vector<16x1xf32>
    %c0_5 = arith.constant 0 : index
    %3 = memref.load %arg4[%c0_5] : memref<1xf32, #tpu.memory_space<smem>>
    %c0_6 = arith.constant 0 : index
    %c0_7 = arith.constant 0 : index
    %c0_8 = arith.constant 0 : index
    %4 = vector.load %arg0[%c0_6, %c0_7, %c0_8] : memref<2x32x8xf32, #tpu.memory_space<vmem>>, vector<1x32x8xf32>
    %5 = vector.shape_cast %4 : vector<1x32x8xf32> to vector<32x8xf32>
    %cst = arith.constant dense<0.000000e+00> : vector<16x8xf32>
    %6 = tpu.matmul %0, %5, %cst {dimension_numbers = #tpu.dot_dimension_numbers<[1], [0], [0], [1], [0, 0, 1, 1], [], []>} : vector<16x32xf32>, vector<32x8xf32>, vector<16x8xf32> -> vector<16x8xf32>
    %7 = vector.broadcast %1 : vector<16x1xf32> to vector<16x8xf32>
    %8 = arith.addf %6, %7 : vector<16x8xf32>
    %9 = math.tanh %8 : vector<16x8xf32>
    %10 = vector.broadcast %2 : vector<16x1xf32> to vector<16x8xf32>
    %11 = arith.mulf %9, %10 : vector<16x8xf32>
    %cst_9 = arith.constant dense<0.000000e+00> : vector<8xf32>
    %12 = vector.multi_reduction <add>, %11, %cst_9 [0] : vector<16x8xf32> to vector<8xf32>
    %13 = vector.shape_cast %12 : vector<8xf32> to vector<1x8xf32>
    %14 = vector.broadcast %3 : f32 to vector<1x8xf32>
    %15 = arith.addf %13, %14 : vector<1x8xf32>
    %cst_10 = arith.constant dense<0xFF800000> : vector<1xf32>
    %16 = vector.multi_reduction <maximumf>, %15, %cst_10 [1] : vector<1x8xf32> to vector<1xf32>
    %17 = vector.shape_cast %16 : vector<1xf32> to vector<1x1xf32>
    %18 = vector.broadcast %17 : vector<1x1xf32> to vector<1x8xf32>
    %19 = arith.subf %15, %18 : vector<1x8xf32>
    %20 = math.exp %19 : vector<1x8xf32>
    %cst_11 = arith.constant dense<0.000000e+00> : vector<1xf32>
    %21 = vector.multi_reduction <add>, %20, %cst_11 [1] : vector<1x8xf32> to vector<1xf32>
    %22 = vector.shape_cast %21 : vector<1xf32> to vector<1x1xf32>
    %23 = tpu.reciprocal %22 {approx = true} : vector<1x1xf32> -> vector<1x1xf32>
    %24 = vector.broadcast %23 : vector<1x1xf32> to vector<1x8xf32>
    %25 = arith.mulf %20, %24 : vector<1x8xf32>
    %cst_12 = arith.constant dense<0.000000e+00> : vector<1x32xf32>
    %26 = tpu.matmul %25, %5, %cst_12 {dimension_numbers = #tpu.dot_dimension_numbers<[1], [1], [0], [0], [0, 0, 1, 0], [], []>} : vector<1x8xf32>, vector<32x8xf32>, vector<1x32xf32> -> vector<1x32xf32>
    %c0_13 = arith.constant 0 : index
    %c0_14 = arith.constant 0 : index
    %27 = vector.load %arg5[%c0_13, %c0_14] : memref<2x32xf32, #tpu.memory_space<vmem>>, vector<1x32xf32>
    tpu.vector_store %arg5[%c0_13, %c0_14], %26 {strides = array<i32>} : memref<2x32xf32, #tpu.memory_space<vmem>>, vector<1x32xf32>,
    %c0_15 = arith.constant 0 : index
    %c0_16 = arith.constant 0 : index
    %28 = vector.load %arg6[%c0_15, %c0_16] : memref<2x8xf32, #tpu.memory_space<vmem>>, vector<1x8xf32>
    tpu.vector_store %arg6[%c0_15, %c0_16], %15 {strides = array<i32>} : memref<2x8xf32, #tpu.memory_space<vmem>>, vector<1x8xf32>,
    %c1 = arith.constant 1 : index
    %c0_17 = arith.constant 0 : index
    %c0_18 = arith.constant 0 : index
    %29 = vector.load %arg0[%c1, %c0_17, %c0_18] : memref<2x32x8xf32, #tpu.memory_space<vmem>>, vector<1x32x8xf32>
    %30 = vector.shape_cast %29 : vector<1x32x8xf32> to vector<32x8xf32>
    %cst_19 = arith.constant dense<0.000000e+00> : vector<16x8xf32>
    %31 = tpu.matmul %0, %30, %cst_19 {dimension_numbers = #tpu.dot_dimension_numbers<[1], [0], [0], [1], [0, 0, 1, 1], [], []>} : vector<16x32xf32>, vector<32x8xf32>, vector<16x8xf32> -> vector<16x8xf32>
    %32 = vector.broadcast %1 : vector<16x1xf32> to vector<16x8xf32>
    %33 = arith.addf %31, %32 : vector<16x8xf32>
    %34 = math.tanh %33 : vector<16x8xf32>
    %35 = vector.broadcast %2 : vector<16x1xf32> to vector<16x8xf32>
    %36 = arith.mulf %34, %35 : vector<16x8xf32>
    %cst_20 = arith.constant dense<0.000000e+00> : vector<8xf32>
    %37 = vector.multi_reduction <add>, %36, %cst_20 [0] : vector<16x8xf32> to vector<8xf32>
    %38 = vector.shape_cast %37 : vector<8xf32> to vector<1x8xf32>
    %39 = vector.broadcast %3 : f32 to vector<1x8xf32>
    %40 = arith.addf %38, %39 : vector<1x8xf32>
    %cst_21 = arith.constant dense<0xFF800000> : vector<1xf32>
    %41 = vector.multi_reduction <maximumf>, %40, %cst_21 [1] : vector<1x8xf32> to vector<1xf32>
    %42 = vector.shape_cast %41 : vector<1xf32> to vector<1x1xf32>
    %43 = vector.broadcast %42 : vector<1x1xf32> to vector<1x8xf32>
    %44 = arith.subf %40, %43 : vector<1x8xf32>
    %45 = math.exp %44 : vector<1x8xf32>
    %cst_22 = arith.constant dense<0.000000e+00> : vector<1xf32>
    %46 = vector.multi_reduction <add>, %45, %cst_22 [1] : vector<1x8xf32> to vector<1xf32>
    %47 = vector.shape_cast %46 : vector<1xf32> to vector<1x1xf32>
    %48 = tpu.reciprocal %47 {approx = true} : vector<1x1xf32> -> vector<1x1xf32>
    %49 = vector.broadcast %48 : vector<1x1xf32> to vector<1x8xf32>
    %50 = arith.mulf %45, %49 : vector<1x8xf32>
    %cst_23 = arith.constant dense<0.000000e+00> : vector<1x32xf32>
    %51 = tpu.matmul %50, %30, %cst_23 {dimension_numbers = #tpu.dot_dimension_numbers<[1], [1], [0], [0], [0, 0, 1, 0], [], []>} : vector<1x8xf32>, vector<32x8xf32>, vector<1x32xf32> -> vector<1x32xf32>
    %c1_24 = arith.constant 1 : index
    %c0_25 = arith.constant 0 : index
    %52 = vector.load %arg5[%c1_24, %c0_25] : memref<2x32xf32, #tpu.memory_space<vmem>>, vector<1x32xf32>
    tpu.vector_store %arg5[%c1_24, %c0_25], %51 {strides = array<i32>} : memref<2x32xf32, #tpu.memory_space<vmem>>, vector<1x32xf32>,
    %c1_26 = arith.constant 1 : index
    %c0_27 = arith.constant 0 : index
    %53 = vector.load %arg6[%c1_26, %c0_27] : memref<2x8xf32, #tpu.memory_space<vmem>>, vector<1x8xf32>
    tpu.vector_store %arg6[%c1_26, %c0_27], %40 {strides = array<i32>} : memref<2x8xf32, #tpu.memory_space<vmem>>, vector<1x8xf32>,
    return
  }
}

</mosaic_0001>

<llo_original>
// kernel: tpu_custom_call.1
$region0: #{tpu_custom_call.1}
  #allocation0 [shape = 'u32[]', space=smem, size = 0x4, offset = 0x4, fixed_abs, tag = 'smem constant byte address 0x4 - core index']
  #allocation1 [shape = 'u32[72,128]{1,0:T(1,128)}', space=vmem, size = 0x9000, scoped, tag = 'internal scratch']
  #allocation2 [shape = 'f32[1]{0:T(128)S(6)}', space=smem, size = 0x200, scoped, tag = 'scoped memory for tpu_custom_call.1']
  %s0 = inlined_call_operand.vmem [shape: f32[2,32,8], index: 0, kind: input, shape index: {}]
  %s1 = inlined_call_operand.vmem [shape: f32[16,32], index: 1, kind: input, shape index: {}]
  %s2 = inlined_call_operand.vmem [shape: f32[16,1], index: 2, kind: input, shape index: {}]
  %s3 = inlined_call_operand.vmem [shape: f32[16,1], index: 3, kind: input, shape index: {}]
  %s4 = inlined_call_operand.<no memory space> [shape: f32[1], index: 4, kind: input, shape index: {}]
  %s5 = inlined_call_operand.hbm [shape: f32[2,32], index: 5, kind: output, shape index: {0}]
  %s6 = inlined_call_operand.hbm [shape: f32[2,8], index: 6, kind: output, shape index: {1}]
  %7 = xla_tuple %s5, %s6
  %s8 = sld [smem:[#allocation0]]
  $region38: #{tpu_custom_call.1} parent=0
    _
  %s10 = ssub.s32 1, %s8
  %s11 = scalar_select 0, %s10, %s8
  %12 = sst [smem:[#allocation2]] %s4
  $region1: #{tpu_custom_call.1} parent=0
    #allocation3 [shape = 'u8[1024]{0}', space=vmem, size = 0x400, scoped, tag = 'output window, operand 0, single buffered']
    #allocation4 [shape = 's32[1]{0}', space=sflag, size = 0x4, scoped, tag = 'scoped memory for tpu_custom_call.1']
    #allocation5 [shape = 'u8[1024]{0}', space=vmem, size = 0x400, scoped, tag = 'output window, operand 1, single buffered']
    #allocation6 [shape = 's32[1]{0}', space=sflag, size = 0x4, scoped, tag = 'scoped memory for tpu_custom_call.1']
    %13 = vsyncpa [#allocation4], 0
    %14 = vsyncpa [#allocation6], 0
    // Predicated region
    $region2: #{tpu_custom_call.1} parent=1 // pred_check
      _
    $region3: #{tpu_custom_call.1} parent=1 // pred_check_branch
      %16 = sbr.rel (0) target = $region5
    $region4: #{tpu_custom_call.1} parent=1 // pred_region
      _
    $region5: #{tpu_custom_call.1} parent=1 // pred_fallthru
      _
    // Predicated region
    $region6: #{tpu_custom_call.1} parent=1 // pred_check
      _
    $region7: #{tpu_custom_call.1} parent=1 // pred_check_branch
      %18 = sbr.rel (0) target = $region9
    $region8: #{tpu_custom_call.1} parent=1 // pred_region
      _
    $region9: #{tpu_custom_call.1} parent=1 // pred_fallthru
      _
    // Predicated region
    $region10: #{tpu_custom_call.1} parent=1 // pred_check
      _
    $region11: #{tpu_custom_call.1} parent=1 // pred_check_branch
      %20 = sbr.rel (0) target = $region13
    $region12: #{tpu_custom_call.1} parent=1 // pred_region
      _
    $region13: #{tpu_custom_call.1} parent=1 // pred_fallthru
      _
    // Predicated region
    $region14: #{tpu_custom_call.1} parent=1 // pred_check
      _
    $region15: #{tpu_custom_call.1} parent=1 // pred_check_branch
      %22 = sbr.rel (0) target = $region17
    $region16: #{tpu_custom_call.1} parent=1 // pred_region
      _
    $region17: #{tpu_custom_call.1} parent=1 // pred_fallthru
      _
    // Predicated region
    $region18: #{tpu_custom_call.1} parent=1 // pred_check
      _
    $region19: #{tpu_custom_call.1} parent=1 // pred_check_branch
      %24 = sbr.rel (0) target = $region21
    $region20: #{tpu_custom_call.1} parent=1 // pred_region
      _
    $region21: #{tpu_custom_call.1} parent=1 // pred_fallthru
      _
    %v25 = vld [vmem:[%s1] sm:$0xff]
    %v26 = vld [vmem:[%s1 + $0x8] sm:$0xff]
    %v27 = vld [vmem:[%s2] sm:$0xff]
    %v28 = vld [vmem:[%s2 + $0x8] sm:$0xff]
    %v29 = vld [vmem:[%s3] sm:$0xff]
    %v30 = vld [vmem:[%s3 + $0x8] sm:$0xff]
    %s31 = sld [smem:[#allocation2]]
    %v32 = vld [vmem:[%s0] sm:$0xff]
    %v33 = vld [vmem:[%s0 + $0x8] sm:$0xff]
    %v34 = vld [vmem:[%s0 + $0x10] sm:$0xff]
    %v35 = vld [vmem:[%s0 + $0x18] sm:$0xff]
    %37 = vset.pattern.permute.xlu0 0
    %38 = vperm.xlu0 %37, %v27
    %v39 = vpop.permute.xlu0 %38
    %42 = vset.pattern.permute.xlu0 0
    %43 = vperm.xlu0 %42, %v28
    %v44 = vpop.permute.xlu0 %43
    %vm46 = vcmask 261120
    %v48 = vsel %vm46, %v25, 0
    %v51 = vsel %vm46, %v26, 0
    %53 = vmatpush.msra.mxu0 0.0
    %54 = vmatpush.msra.mxu0 0.0
    %55 = vmatpush.msra.mxu0 0.0
    %56 = vmatpush.msra.mxu0 0.0
    %57 = vmatpush.msra.mxu0 0.0
    %58 = vmatpush.msra.mxu0 0.0
    %59 = vmatpush.msra.mxu0 0.0
    %60 = vmatpush.msra.mxu0 0.0
    %61 = vmatpush.msra.mxu0 0.0
    %62 = vmatpush.msra.mxu0 0.0
    %63 = vmatpush.msra.mxu0 0.0
    %64 = vmatpush.msra.mxu0 0.0
    %65 = vmatpush.msra.mxu0 %v35
    %66 = vmatpush.msra.mxu0 %v34
    %67 = vmatpush.msra.mxu0 %v33
    %68 = vmatpush.msra.mxu0 %v32
    %69 = vmatmul.f32.gmra.mxu0 %v48
    %v70 = vpop.f32.mrf.mxu0
    %v71 = vadd.f32 %v39, %v70
    %72 = vmatmul.f32.gmra.mxu0 %v51
    %v73 = vpop.f32.mrf.mxu0
    %v74 = vadd.f32 %v44, %v73
    %75 = vdwg.mxu0
    %v76 = vtanh.pop %v71
    %v77 = vtanh.pop %v74
    %79 = vset.pattern.permute.xlu0 0
    %80 = vperm.xlu0 %79, %v29
    %v81 = vpop.permute.xlu0 %80
    %84 = vset.pattern.permute.xlu0 0
    %85 = vperm.xlu0 %84, %v30
    %v86 = vpop.permute.xlu0 %85
    %v88 = vmul.f32 %v76, %v81
    %v89 = vmul.f32 %v77, %v86
    %vm90 = vcmask 64512
    %v91 = vsel %vm90, %v88, 0.0
    %v92 = vsel %vm90, %v89, 0.0
    %v93 = vadd.f32 %v91, %v92
    %v94 = vrot.slane %v93, 4
    %v95 = vadd.f32 %v93, %v94
    %v96 = vrot.slane %v95, 2
    %v97 = vadd.f32 %v95, %v96
    %v98 = vrot.slane %v97, 1
    %v99 = vadd.f32 %v97, %v98
    %v100 = vstv %s31
    %v101 = vadd.f32 %v99, %v100
    %v102 = vsel %vm90, %v101, -inf
    %103 = vmax.xlane.f32.xlu0 %v102
    %v104 = vpop.xlane.xlu0 %103
    %v105 = vsub.f32 %v101, %v104
    %v106 = vmul.f32 %v105, 1.442695
    %v107 = vpow.pop %v106
    %v108 = vsel %vm90, %v107, 0.0
    %109 = vadd.xlane.f32.xlu0 %v108
    %v110 = vpop.xlane.xlu0 %109
    %v111 = vrcp.pop %v110
    %v112 = vmul.f32 %v107, %v111
    %v114 = vsel %vm90, %v112, 0
    %v117 = vsel %vm90, %v32, 0
    %v120 = vsel %vm90, %v33, 0
    %v123 = vsel %vm90, %v34, 0
    %v126 = vsel %vm90, %v35, 0
    %128 = vmatpush.xpose.msra.mxu0 0.0
    %129 = vmatpush.xpose.msra.mxu0 0.0
    %130 = vmatpush.xpose.msra.mxu0 0.0
    %131 = vmatpush.xpose.msra.mxu0 0.0
    %132 = vmatpush.xpose.msra.mxu0 0.0
    %133 = vmatpush.xpose.msra.mxu0 0.0
    %134 = vmatpush.xpose.msra.mxu0 0.0
    %135 = vmatpush.xpose.msra.mxu0 0.0
    %136 = vmatpush.xpose.msra.mxu0 0.0
    %137 = vmatpush.xpose.msra.mxu0 0.0
    %138 = vmatpush.xpose.msra.mxu0 0.0
    %139 = vmatpush.xpose.msra.mxu0 0.0
    %140 = vmatpush.xpose.msra.mxu0 %v126
    %141 = vmatpush.xpose.msra.mxu0 %v123
    %142 = vmatpush.xpose.msra.mxu0 %v120
    %143 = vmatpush.xpose.msra.mxu0 %v117
    %144 = vmatmul.f32.gmra.mxu0 %v114
    %v145 = vpop.f32.mrf.mxu0
    %v146 = vadd.f32 0.0, %v145
    %147 = vdwg.mxu0
    %vm148 = vcmask 253952
    %149 = vst.msk [vmem:[#allocation3] sm:$0x1] %vm148, %v146
    %vm150 = vcmask 57344
    %151 = vst.msk [vmem:[#allocation5] sm:$0x1] %vm150, %v101
    %s152 = scalar_lea.vmem %s0, 32
    %v153 = vld [vmem:[%s152] sm:$0xff]
    %v154 = vld [vmem:[%s152 + $0x8] sm:$0xff]
    %v155 = vld [vmem:[%s152 + $0x10] sm:$0xff]
    %v156 = vld [vmem:[%s152 + $0x18] sm:$0xff]
    %157 = vmatpush.msra.mxu0 0.0
    %158 = vmatpush.msra.mxu0 0.0
    %159 = vmatpush.msra.mxu0 0.0
    %160 = vmatpush.msra.mxu0 0.0
    %161 = vmatpush.msra.mxu0 0.0
    %162 = vmatpush.msra.mxu0 0.0
    %163 = vmatpush.msra.mxu0 0.0
    %164 = vmatpush.msra.mxu0 0.0
    %165 = vmatpush.msra.mxu0 0.0
    %166 = vmatpush.msra.mxu0 0.0
    %167 = vmatpush.msra.mxu0 0.0
    %168 = vmatpush.msra.mxu0 0.0
    %169 = vmatpush.msra.mxu0 %v156
    %170 = vmatpush.msra.mxu0 %v155
    %171 = vmatpush.msra.mxu0 %v154
    %172 = vmatpush.msra.mxu0 %v153
    %173 = vmatmul.f32.gmra.mxu0 %v48
    %v174 = vpop.f32.mrf.mxu0
    %v175 = vadd.f32 %v39, %v174
    %176 = vmatmul.f32.gmra.mxu0 %v51
    %v177 = vpop.f32.mrf.mxu0
    %v178 = vadd.f32 %v44, %v177
    %179 = vdwg.mxu0
    %v180 = vtanh.pop %v175
    %v181 = vtanh.pop %v178
    %v182 = vmul.f32 %v180, %v81
    %v183 = vmul.f32 %v181, %v86
    %v184 = vsel %vm90, %v182, 0.0
    %v185 = vsel %vm90, %v183, 0.0
    %v186 = vadd.f32 %v184, %v185
    %v187 = vrot.slane %v186, 4
    %v188 = vadd.f32 %v186, %v187
    %v189 = vrot.slane %v188, 2
    %v190 = vadd.f32 %v188, %v189
    %v191 = vrot.slane %v190, 1
    %v192 = vadd.f32 %v190, %v191
    %v193 = vadd.f32 %v192, %v100
    %v194 = vsel %vm90, %v193, -inf
    %195 = vmax.xlane.f32.xlu0 %v194
    %v196 = vpop.xlane.xlu0 %195
    %v197 = vsub.f32 %v193, %v196
    %v198 = vmul.f32 %v197, 1.442695
    %v199 = vpow.pop %v198
    %v200 = vsel %vm90, %v199, 0.0
    %201 = vadd.xlane.f32.xlu0 %v200
    %v202 = vpop.xlane.xlu0 %201
    %v203 = vrcp.pop %v202
    %v204 = vmul.f32 %v199, %v203
    %v206 = vsel %vm90, %v204, 0
    %v209 = vsel %vm90, %v153, 0
    %v212 = vsel %vm90, %v154, 0
    %v215 = vsel %vm90, %v155, 0
    %v218 = vsel %vm90, %v156, 0
    %220 = vmatpush.xpose.msra.mxu0 0.0
    %221 = vmatpush.xpose.msra.mxu0 0.0
    %222 = vmatpush.xpose.msra.mxu0 0.0
    %223 = vmatpush.xpose.msra.mxu0 0.0
    %224 = vmatpush.xpose.msra.mxu0 0.0
    %225 = vmatpush.xpose.msra.mxu0 0.0
    %226 = vmatpush.xpose.msra.mxu0 0.0
    %227 = vmatpush.xpose.msra.mxu0 0.0
    %228 = vmatpush.xpose.msra.mxu0 0.0
    %229 = vmatpush.xpose.msra.mxu0 0.0
    %230 = vmatpush.xpose.msra.mxu0 0.0
    %231 = vmatpush.xpose.msra.mxu0 0.0
    %232 = vmatpush.xpose.msra.mxu0 %v218
    %233 = vmatpush.xpose.msra.mxu0 %v215
    %234 = vmatpush.xpose.msra.mxu0 %v212
    %235 = vmatpush.xpose.msra.mxu0 %v209
    %236 = vmatmul.f32.gmra.mxu0 %v206
    %v237 = vpop.f32.mrf.mxu0
    %v238 = vadd.f32 0.0, %v237
    %239 = vdwg.mxu0
    %240 = vst.msk [vmem:[#allocation3 + $0x1] sm:$0x1] %vm148, %v238
    %241 = vst.msk [vmem:[#allocation5 + $0x1] sm:$0x1] %vm150, %v193
    // Predicated region
    $region22: #{tpu_custom_call.1} parent=1 // pred_check
      _
    $region23: #{tpu_custom_call.1} parent=1 // pred_check_branch
      %243 = sbr.rel (0) target = $region25
    $region24: #{tpu_custom_call.1} parent=1 // pred_region
      %245 = vsyncadd [#allocation4], 0
      %s247 = sshll.u32 [#allocation3], 4
      %s248 = int_to_ptr.vmem [resolvable:$true] %s247
      %s249 = sshll.u32 %s5, 4
      %s250 = int_to_ptr.hbm [resolvable:$true] %s249
      %252 = dma.vmem_to_hbm [thread:$0]  %s248, 32, %s250, [#allocation4]
    $region25: #{tpu_custom_call.1} parent=1 // pred_fallthru
      _
    // Predicated region
    $region26: #{tpu_custom_call.1} parent=1 // pred_check
      _
    $region27: #{tpu_custom_call.1} parent=1 // pred_check_branch
      %254 = sbr.rel (0) target = $region29
    $region28: #{tpu_custom_call.1} parent=1 // pred_region
      %256 = vsyncadd [#allocation6], 0
      %s258 = sshll.u32 [#allocation5], 4
      %s259 = int_to_ptr.vmem [resolvable:$true] %s258
      %s260 = sshll.u32 %s6, 4
      %s261 = int_to_ptr.hbm [resolvable:$true] %s260
      %263 = dma.vmem_to_hbm [thread:$0]  %s259, 32, %s261, [#allocation6]
    $region29: #{tpu_custom_call.1} parent=1 // pred_fallthru
      _
    // Predicated region
    $region30: #{tpu_custom_call.1} parent=1 // pred_check
      _
    $region31: #{tpu_custom_call.1} parent=1 // pred_check_branch
      %265 = sbr.rel (0) target = $region33
    $region32: #{tpu_custom_call.1} parent=1 // pred_region
      %267 = dma.done [#allocation4], 32
    $region33: #{tpu_custom_call.1} parent=1 // pred_fallthru
      _
    // Predicated region
    $region34: #{tpu_custom_call.1} parent=1 // pred_check
      _
    $region35: #{tpu_custom_call.1} parent=1 // pred_check_branch
      %269 = sbr.rel (0) target = $region37
    $region36: #{tpu_custom_call.1} parent=1 // pred_region
      %271 = dma.done [#allocation6], 32
    $region37: #{tpu_custom_call.1} parent=1 // pred_fallthru
      _
    %272 = vsyncpa [#allocation4], 1
    %273 = vsyncpa [#allocation6], 1

</llo_original>
